<compile_context>
chip_gen: v7x
topology: tpu7x:2x2x1
jax: 0.10.0
libtpu: 0.0.40
codegen_flags: <defaults>
</compile_context>

<pallas_src>
import functools

import jax
import jax.numpy as jnp
from jax.experimental import pallas as pl
from jax.experimental.pallas import tpu as pltpu

HIDDEN = 128            # hidden width from the PyTorch module
N_LAYERS = 6            # 1 input layer + 4 hidden layers + 1 output layer
PAD_FEAT = 128          # lane-aligned feature width for hidden/output layers
MAX_BATCH_TILE = 256    # cap on the batch tile (MXU rows per block)


def _round_up(x, m):
    return ((x + m - 1) // m) * m


def _dqn_kernel(x_ref, w_ref, b_ref, o_ref, *, n_obs):
    """All 6 Linear layers + ReLU fused, fully VMEM-resident.

    x_ref: (bb, n_obs) bf16
    w_ref: (6, 128, 128) bf16   (stored (in, out) = PyTorch weight transposed)
    b_ref: (6, 1, 128) f32
    o_ref: (bb, 128) f32
    """
    h = x_ref[...]                                       # bf16 activations
    # first layer: contract only the first n_obs weight rows (static slice)
    h = jnp.dot(h, w_ref[0, :n_obs, :], preferred_element_type=jnp.float32)
    h = jnp.maximum(h + b_ref[0], 0.0)                   # f32 VPU path
    # hidden layers 1..4: Linear -> ReLU (bf16 MXU inputs, f32 accumulate)
    for i in range(1, N_LAYERS - 1):
        h = jnp.dot(h.astype(jnp.bfloat16), w_ref[i],
                    preferred_element_type=jnp.float32)
        h = jnp.maximum(h + b_ref[i], 0.0)
    # output layer: Linear (no activation)
    h = jnp.dot(h.astype(jnp.bfloat16), w_ref[N_LAYERS - 1],
                preferred_element_type=jnp.float32)
    o_ref[...] = (h + b_ref[N_LAYERS - 1]).astype(o_ref.dtype)


def pack_dqn_params(weights, biases):
    """Pad + pack parameters ONCE (call at init, not per forward).

    weights[i]: (in_i, out_i) f32, biases[i]: (out_i,) f32
    Returns: w_packed (6,128,128) bf16, b_packed (6,1,128) f32.
    """
    assert len(weights) == N_LAYERS and len(biases) == N_LAYERS
    w_packed = jnp.zeros((N_LAYERS, PAD_FEAT, PAD_FEAT), jnp.float32)
    b_packed = jnp.zeros((N_LAYERS, 1, PAD_FEAT), jnp.float32)
    for i, (w, b) in enumerate(zip(weights, biases)):
        in_d, out_d = w.shape
        assert in_d <= PAD_FEAT and out_d <= PAD_FEAT, (
            "n_observations / n_actions must be <= 128 for this kernel")
        w_packed = w_packed.at[i, :in_d, :out_d].set(w)
        b_packed = b_packed.at[i, 0, :out_d].set(b)
    return w_packed.astype(jnp.bfloat16), b_packed


def _pick_batch_tile(B):
    """Static batch-tile selection (B is a trace-time shape)."""
    if B <= 8:
        return 8                               # single tiny block (act() path)
    # >= 2 blocks so the 'parallel' axis feeds both v7x TensorCores; blocks of
    # up to 256 rows for big batches (256-wide MXU on v6e/v7x; harmless on v5e).
    return min(MAX_BATCH_TILE, _round_up(pl.cdiv(B, 2), 8))


@functools.partial(jax.jit, static_argnames=("n_actions",))
def dqn_forward(x, w_packed, b_packed, n_actions):
    """x: (B, n_observations) f32. Packed params from pack_dqn_params."""
    B, n_obs = x.shape
    assert n_obs <= PAD_FEAT and n_actions <= PAD_FEAT

    bb = _pick_batch_tile(B)
    b_pad = pl.cdiv(B, bb) * bb                # exact multiple of bb

    # only per-call prep: bf16 cast (+ batch pad when B is not a tile multiple)
    x_bf16 = x.astype(jnp.bfloat16)
    if b_pad != B:
        x_bf16 = jnp.pad(x_bf16, ((0, b_pad - B), (0, 0)))

    out_padded = pl.pallas_call(
        functools.partial(_dqn_kernel, n_obs=n_obs),
        out_shape=jax.ShapeDtypeStruct((b_pad, PAD_FEAT), jnp.float32),
        grid=(b_pad // bb,),
        in_specs=[
            # last dim == full array dim (n_obs), so no 128-alignment needed
            pl.BlockSpec((bb, n_obs), lambda i: (i, 0)),
            pl.BlockSpec((N_LAYERS, PAD_FEAT, PAD_FEAT), lambda i: (0, 0, 0)),
            pl.BlockSpec((N_LAYERS, 1, PAD_FEAT), lambda i: (0, 0, 0)),
        ],
        # lane-dense 128-wide f32 output (never shrink below 128 lanes)
        out_specs=pl.BlockSpec((bb, PAD_FEAT), lambda i: (i, 0)),
        compiler_params=pltpu.CompilerParams(
            # batch axis is independent -> megacore / both v7x TCs get work
            dimension_semantics=("parallel",)),
    )(x_bf16, w_packed, b_packed)

    return out_padded[:B, :n_actions]


def init_dqn_params(key, n_observations, n_actions):
    """Deterministic init mirroring nn.Linear default (uniform +/- 1/sqrt(fan_in))."""
    dims = [n_observations] + [HIDDEN] * 5 + [n_actions]
    weights, biases = [], []
    for i in range(N_LAYERS):
        fan_in, fan_out = dims[i], dims[i + 1]
        key, kw, kb = jax.random.split(key, 3)
        bound = 1.0 / jnp.sqrt(jnp.float32(fan_in))
        # stored as (in, out) = transpose of PyTorch's (out, in)
        w = jax.random.uniform(kw, (fan_in, fan_out), jnp.float32, -bound, bound)
        b = jax.random.uniform(kb, (fan_out,), jnp.float32, -bound, bound)
        weights.append(w)
        biases.append(b)
    return weights, biases


def dqn_reference_f32(x, weights, biases):
    """Pure-JAX f32 reference of the PyTorch forward."""
    h = x
    for i in range(N_LAYERS - 1):
        h = jnp.maximum(h @ weights[i] + biases[i], 0.0)
    return h @ weights[-1] + biases[-1]


def dqn_reference_bf16(x, weights, biases):
    """Pure-JAX reference matching the kernel's bf16-input / f32-accum math."""
    h = x
    for i in range(N_LAYERS - 1):
        h = jnp.maximum(
            jnp.dot(h.astype(jnp.bfloat16), weights[i].astype(jnp.bfloat16),
                    preferred_element_type=jnp.float32) + biases[i], 0.0)
    return jnp.dot(h.astype(jnp.bfloat16), weights[-1].astype(jnp.bfloat16),
                   preferred_element_type=jnp.float32) + biases[-1]


if __name__ == "__main__":
    n_observations = 16
    n_actions = 8

    key = jax.random.PRNGKey(0)
    key, kx_small, kx_mid, kx_big = jax.random.split(key, 4)
    weights, biases = init_dqn_params(key, n_observations, n_actions)
    # one-time packing (NOT inside the per-step forward path)
    w_packed, b_packed = pack_dqn_params(weights, biases)

    # tiny batch: single 8-row block (act() path)
    x_small = jax.random.normal(kx_small, (2, n_observations), jnp.float32)
    out_small = jax.block_until_ready(
        dqn_forward(x_small, w_packed, b_packed, n_actions))
    assert out_small.shape == (2, n_actions), out_small.shape
    assert jnp.allclose(out_small, dqn_reference_bf16(x_small, weights, biases),
                        atol=1e-2, rtol=1e-2)
    assert jnp.allclose(out_small, dqn_reference_f32(x_small, weights, biases),
                        atol=1e-1, rtol=1e-1)

    # mid batch: exercises the >=2-block adaptive tile (bb = 16 here)
    x_mid = jax.random.normal(kx_mid, (32, n_observations), jnp.float32)
    out_mid = jax.block_until_ready(
        dqn_forward(x_mid, w_packed, b_packed, n_actions))
    assert out_mid.shape == (32, n_actions), out_mid.shape
    assert jnp.allclose(out_mid, dqn_reference_bf16(x_mid, weights, biases),
                        atol=1e-2, rtol=1e-2)

    # large batch: 2 x 128-row blocks on the parallel batch axis
    x_big = jax.random.normal(kx_big, (256, n_observations), jnp.float32)
    out_big = jax.block_until_ready(
        dqn_forward(x_big, w_packed, b_packed, n_actions))
    assert out_big.shape == (256, n_actions), out_big.shape
    assert jnp.allclose(out_big, dqn_reference_bf16(x_big, weights, biases),
                        atol=1e-2, rtol=1e-2)

    print("KERNEL_OK")
</pallas_src>

<mosaic_0001>
module attributes {stable_mosaic.version = 11 : i64} {
  func.func @_dqn_kernel(%arg0: i32, %arg1: memref<8x16xbf16, #tpu.memory_space<vmem>>, %arg2: memref<6x128x128xbf16, #tpu.memory_space<vmem>>, %arg3: memref<6x1x128xf32, #tpu.memory_space<vmem>>, %arg4: memref<8x128xf32, #tpu.memory_space<vmem>>) attributes {dimension_semantics = [#tpu.dimension_semantics<parallel>], iteration_bounds = array<i64: 1>, scalar_prefetch = 0 : i64, scratch_operands = 0 : i64, tpu.core_type = #tpu.core_type<tc>, window_params = [{transform_indices = @transform_0, window_bounds = array<i64: 8, 16>}, {pipeline_mode = #tpu.pipeline_mode<synchronous>, transform_indices = @transform_1, window_bounds = array<i64: 6, 128, 128>}, {pipeline_mode = #tpu.pipeline_mode<synchronous>, transform_indices = @transform_2, window_bounds = array<i64: 6, 1, 128>}, {transform_indices = @transform_3, window_bounds = array<i64: 8, 128>}]} {
    %c0 = arith.constant 0 : index
    %c0_0 = arith.constant 0 : index
    %0 = vector.load %arg1[%c0, %c0_0] : memref<8x16xbf16, #tpu.memory_space<vmem>>, vector<8x16xbf16>
    %c0_1 = arith.constant 0 : index
    %c0_2 = arith.constant 0 : index
    %c0_3 = arith.constant 0 : index
    %1 = vector.load %arg2[%c0_1, %c0_2, %c0_3] : memref<6x128x128xbf16, #tpu.memory_space<vmem>>, vector<1x16x128xbf16>
    %2 = vector.shape_cast %1 : vector<1x16x128xbf16> to vector<16x128xbf16>
    %cst = arith.constant dense<0.000000e+00> : vector<8x128xf32>
    %3 = tpu.matmul %0, %2, %cst {dimension_numbers = #tpu.dot_dimension_numbers<[1], [0], [0], [1], [0, 0, 1, 1], [], []>} : vector<8x16xbf16>, vector<16x128xbf16>, vector<8x128xf32> -> vector<8x128xf32>
    %c0_4 = arith.constant 0 : index
    %c0_5 = arith.constant 0 : index
    %c0_6 = arith.constant 0 : index
    %4 = vector.load %arg3[%c0_4, %c0_5, %c0_6] : memref<6x1x128xf32, #tpu.memory_space<vmem>>, vector<1x1x128xf32>
    %5 = vector.shape_cast %4 : vector<1x1x128xf32> to vector<1x128xf32>
    %6 = vector.broadcast %5 : vector<1x128xf32> to vector<8x128xf32>
    %7 = arith.addf %3, %6 : vector<8x128xf32>
    %cst_7 = arith.constant 0.000000e+00 : f32
    %8 = vector.broadcast %cst_7 : f32 to vector<8x128xf32>
    %9 = arith.maximumf %7, %8 : vector<8x128xf32>
    %10 = arith.truncf %9 : vector<8x128xf32> to vector<8x128xbf16>
    %c1 = arith.constant 1 : index
    %c0_8 = arith.constant 0 : index
    %c0_9 = arith.constant 0 : index
    %11 = vector.load %arg2[%c1, %c0_8, %c0_9] : memref<6x128x128xbf16, #tpu.memory_space<vmem>>, vector<1x128x128xbf16>
    %12 = vector.shape_cast %11 : vector<1x128x128xbf16> to vector<128x128xbf16>
    %cst_10 = arith.constant dense<0.000000e+00> : vector<8x128xf32>
    %13 = tpu.matmul %10, %12, %cst_10 {dimension_numbers = #tpu.dot_dimension_numbers<[1], [0], [0], [1], [0, 0, 1, 1], [], []>} : vector<8x128xbf16>, vector<128x128xbf16>, vector<8x128xf32> -> vector<8x128xf32>
    %c1_11 = arith.constant 1 : index
    %c0_12 = arith.constant 0 : index
    %c0_13 = arith.constant 0 : index
    %14 = vector.load %arg3[%c1_11, %c0_12, %c0_13] : memref<6x1x128xf32, #tpu.memory_space<vmem>>, vector<1x1x128xf32>
    %15 = vector.shape_cast %14 : vector<1x1x128xf32> to vector<1x128xf32>
    %16 = vector.broadcast %15 : vector<1x128xf32> to vector<8x128xf32>
    %17 = arith.addf %13, %16 : vector<8x128xf32>
    %cst_14 = arith.constant 0.000000e+00 : f32
    %18 = vector.broadcast %cst_14 : f32 to vector<8x128xf32>
    %19 = arith.maximumf %17, %18 : vector<8x128xf32>
    %20 = arith.truncf %19 : vector<8x128xf32> to vector<8x128xbf16>
    %c2 = arith.constant 2 : index
    %c0_15 = arith.constant 0 : index
    %c0_16 = arith.constant 0 : index
    %21 = vector.load %arg2[%c2, %c0_15, %c0_16] : memref<6x128x128xbf16, #tpu.memory_space<vmem>>, vector<1x128x128xbf16>
    %22 = vector.shape_cast %21 : vector<1x128x128xbf16> to vector<128x128xbf16>
    %cst_17 = arith.constant dense<0.000000e+00> : vector<8x128xf32>
    %23 = tpu.matmul %20, %22, %cst_17 {dimension_numbers = #tpu.dot_dimension_numbers<[1], [0], [0], [1], [0, 0, 1, 1], [], []>} : vector<8x128xbf16>, vector<128x128xbf16>, vector<8x128xf32> -> vector<8x128xf32>
    %c2_18 = arith.constant 2 : index
    %c0_19 = arith.constant 0 : index
    %c0_20 = arith.constant 0 : index
    %24 = vector.load %arg3[%c2_18, %c0_19, %c0_20] : memref<6x1x128xf32, #tpu.memory_space<vmem>>, vector<1x1x128xf32>
    %25 = vector.shape_cast %24 : vector<1x1x128xf32> to vector<1x128xf32>
    %26 = vector.broadcast %25 : vector<1x128xf32> to vector<8x128xf32>
    %27 = arith.addf %23, %26 : vector<8x128xf32>
    %cst_21 = arith.constant 0.000000e+00 : f32
    %28 = vector.broadcast %cst_21 : f32 to vector<8x128xf32>
    %29 = arith.maximumf %27, %28 : vector<8x128xf32>
    %30 = arith.truncf %29 : vector<8x128xf32> to vector<8x128xbf16>
    %c3 = arith.constant 3 : index
    %c0_22 = arith.constant 0 : index
    %c0_23 = arith.constant 0 : index
    %31 = vector.load %arg2[%c3, %c0_22, %c0_23] : memref<6x128x128xbf16, #tpu.memory_space<vmem>>, vector<1x128x128xbf16>
    %32 = vector.shape_cast %31 : vector<1x128x128xbf16> to vector<128x128xbf16>
    %cst_24 = arith.constant dense<0.000000e+00> : vector<8x128xf32>
    %33 = tpu.matmul %30, %32, %cst_24 {dimension_numbers = #tpu.dot_dimension_numbers<[1], [0], [0], [1], [0, 0, 1, 1], [], []>} : vector<8x128xbf16>, vector<128x128xbf16>, vector<8x128xf32> -> vector<8x128xf32>
    %c3_25 = arith.constant 3 : index
    %c0_26 = arith.constant 0 : index
    %c0_27 = arith.constant 0 : index
    %34 = vector.load %arg3[%c3_25, %c0_26, %c0_27] : memref<6x1x128xf32, #tpu.memory_space<vmem>>, vector<1x1x128xf32>
    %35 = vector.shape_cast %34 : vector<1x1x128xf32> to vector<1x128xf32>
    %36 = vector.broadcast %35 : vector<1x128xf32> to vector<8x128xf32>
    %37 = arith.addf %33, %36 : vector<8x128xf32>
    %cst_28 = arith.constant 0.000000e+00 : f32
    %38 = vector.broadcast %cst_28 : f32 to vector<8x128xf32>
    %39 = arith.maximumf %37, %38 : vector<8x128xf32>
    %40 = arith.truncf %39 : vector<8x128xf32> to vector<8x128xbf16>
    %c4 = arith.constant 4 : index
    %c0_29 = arith.constant 0 : index
    %c0_30 = arith.constant 0 : index
    %41 = vector.load %arg2[%c4, %c0_29, %c0_30] : memref<6x128x128xbf16, #tpu.memory_space<vmem>>, vector<1x128x128xbf16>
    %42 = vector.shape_cast %41 : vector<1x128x128xbf16> to vector<128x128xbf16>
    %cst_31 = arith.constant dense<0.000000e+00> : vector<8x128xf32>
    %43 = tpu.matmul %40, %42, %cst_31 {dimension_numbers = #tpu.dot_dimension_numbers<[1], [0], [0], [1], [0, 0, 1, 1], [], []>} : vector<8x128xbf16>, vector<128x128xbf16>, vector<8x128xf32> -> vector<8x128xf32>
    %c4_32 = arith.constant 4 : index
    %c0_33 = arith.constant 0 : index
    %c0_34 = arith.constant 0 : index
    %44 = vector.load %arg3[%c4_32, %c0_33, %c0_34] : memref<6x1x128xf32, #tpu.memory_space<vmem>>, vector<1x1x128xf32>
    %45 = vector.shape_cast %44 : vector<1x1x128xf32> to vector<1x128xf32>
    %46 = vector.broadcast %45 : vector<1x128xf32> to vector<8x128xf32>
    %47 = arith.addf %43, %46 : vector<8x128xf32>
    %cst_35 = arith.constant 0.000000e+00 : f32
    %48 = vector.broadcast %cst_35 : f32 to vector<8x128xf32>
    %49 = arith.maximumf %47, %48 : vector<8x128xf32>
    %50 = arith.truncf %49 : vector<8x128xf32> to vector<8x128xbf16>
    %c5 = arith.constant 5 : index
    %c0_36 = arith.constant 0 : index
    %c0_37 = arith.constant 0 : index
    %51 = vector.load %arg2[%c5, %c0_36, %c0_37] : memref<6x128x128xbf16, #tpu.memory_space<vmem>>, vector<1x128x128xbf16>
    %52 = vector.shape_cast %51 : vector<1x128x128xbf16> to vector<128x128xbf16>
    %cst_38 = arith.constant dense<0.000000e+00> : vector<8x128xf32>
    %53 = tpu.matmul %50, %52, %cst_38 {dimension_numbers = #tpu.dot_dimension_numbers<[1], [0], [0], [1], [0, 0, 1, 1], [], []>} : vector<8x128xbf16>, vector<128x128xbf16>, vector<8x128xf32> -> vector<8x128xf32>
    %c5_39 = arith.constant 5 : index
    %c0_40 = arith.constant 0 : index
    %c0_41 = arith.constant 0 : index
    %54 = vector.load %arg3[%c5_39, %c0_40, %c0_41] : memref<6x1x128xf32, #tpu.memory_space<vmem>>, vector<1x1x128xf32>
    %55 = vector.shape_cast %54 : vector<1x1x128xf32> to vector<1x128xf32>
    %56 = vector.broadcast %55 : vector<1x128xf32> to vector<8x128xf32>
    %57 = arith.addf %53, %56 : vector<8x128xf32>
    %c0_42 = arith.constant 0 : index
    %c0_43 = arith.constant 0 : index
    %58 = vector.load %arg4[%c0_42, %c0_43] : memref<8x128xf32, #tpu.memory_space<vmem>>, vector<8x128xf32>
    tpu.vector_store %arg4[%c0_42, %c0_43], %57 {strides = array<i32>} : memref<8x128xf32, #tpu.memory_space<vmem>>, vector<8x128xf32>,
    return
  }
  func.func @transform_0(%arg0: i32) -> (i32, i32) {
    %c0_i32 = arith.constant 0 : i32
    %c0_i32_0 = arith.constant 0 : i32
    return %arg0, %c0_i32 : i32, i32
  }
  func.func @transform_1(%arg0: i32) -> (i32, i32, i32) {
    %c0_i32 = arith.constant 0 : i32
    %c0_i32_0 = arith.constant 0 : i32
    %c0_i32_1 = arith.constant 0 : i32
    %c0_i32_2 = arith.constant 0 : i32
    return %c0_i32, %c0_i32_0, %c0_i32_1 : i32, i32, i32
  }
  func.func @transform_2(%arg0: i32) -> (i32, i32, i32) {
    %c0_i32 = arith.constant 0 : i32
    %c0_i32_0 = arith.constant 0 : i32
    %c0_i32_1 = arith.constant 0 : i32
    %c0_i32_2 = arith.constant 0 : i32
    return %c0_i32, %c0_i32_0, %c0_i32_1 : i32, i32, i32
  }
  func.func @transform_3(%arg0: i32) -> (i32, i32) {
    %c0_i32 = arith.constant 0 : i32
    %c0_i32_0 = arith.constant 0 : i32
    return %arg0, %c0_i32 : i32, i32
  }
}

</mosaic_0001>

<llo_original>
// kernel: dqn_forward.1
$region0: #{dqn_forward.1}
  #allocation0 [shape = 'u32[]', space=smem, size = 0x4, offset = 0x4, fixed_abs, tag = 'smem constant byte address 0x4 - core index']
  #allocation1 [shape = 'u32[144,128]{1,0:T(1,128)}', space=vmem, size = 0x12000, scoped, tag = 'internal scratch']
  %s0 = inlined_call_operand.vmem [shape: bf16[8,16], index: 0, kind: input, shape index: {}]
  %s1 = inlined_call_operand.hbm [shape: bf16[6,128,128], index: 1, kind: input, shape index: {}]
  %s2 = inlined_call_operand.vmem [shape: f32[6,1,128], index: 2, kind: input, shape index: {}]
  %s3 = inlined_call_operand.vmem [shape: f32[8,128], index: 3, kind: output, shape index: {}]
  %s4 = sld [smem:[#allocation0]]
  $region26: #{dqn_forward.1} parent=0
    _
  %s6 = ssub.s32 1, %s4
  %s7 = scalar_select 0, %s6, %s4
  $region1: #{dqn_forward.1} parent=0
    #allocation2 [shape = 'u8[196608]{0}', space=vmem, size = 0x30000, scoped, tag = 'input window, operand 1, single buffered']
    #allocation3 [shape = 's32[1]{0}', space=sflag, size = 0x4, scoped, tag = 'scoped memory for dqn_forward.1']
    %8 = vsyncpa [#allocation3], 0
    // Predicated region
    $region2: #{dqn_forward.1} parent=1 // pred_check
      _
    $region3: #{dqn_forward.1} parent=1 // pred_check_branch
      %10 = sbr.rel (0) target = $region5
    $region4: #{dqn_forward.1} parent=1 // pred_region
      _
    $region5: #{dqn_forward.1} parent=1 // pred_fallthru
      _
    // Predicated region
    $region6: #{dqn_forward.1} parent=1 // pred_check
      _
    $region7: #{dqn_forward.1} parent=1 // pred_check_branch
      %12 = sbr.rel (0) target = $region9
    $region8: #{dqn_forward.1} parent=1 // pred_region
      %s14 = ssub.s32 6144, 6144
      %15 = vsyncadd [#allocation3], %s14
      %s16 = sshll.u32 [#allocation2], 4
      %s17 = int_to_ptr.vmem [resolvable:$true] %s16
      %22 = dma.hbm_to_vmem [thread:$0]  %s1, 6144, %s17, [#allocation3], 64, 64, 4
    $region9: #{dqn_forward.1} parent=1 // pred_fallthru
      _
    // Predicated region
    $region10: #{dqn_forward.1} parent=1 // pred_check
      _
    $region11: #{dqn_forward.1} parent=1 // pred_check_branch
      %24 = sbr.rel (0) target = $region13
    $region12: #{dqn_forward.1} parent=1 // pred_region
      _
    $region13: #{dqn_forward.1} parent=1 // pred_fallthru
      _
    // Predicated region
    $region14: #{dqn_forward.1} parent=1 // pred_check
      _
    $region15: #{dqn_forward.1} parent=1 // pred_check_branch
      %26 = sbr.rel (0) target = $region17
    $region16: #{dqn_forward.1} parent=1 // pred_region
      %27 = dma.done [#allocation3], 6144
    $region17: #{dqn_forward.1} parent=1 // pred_fallthru
      _
    %v29 = vld [vmem:[%s0] sm:$0xf]
    %v30 = vld [vmem:[#allocation2] sm:$0xf]
    %v31 = vld [vmem:[#allocation2 + $0x4] sm:$0xf]
    %v32 = vld [vmem:[%s2] sm:$0x1]
    %v34 = vlaneseq
    %v35 = vshrl.u32 %v34, 7
    %v36 = vsub.s32 0, %v35
    %v37 = vrot.slane %v32, %v36
    %v41 = vunpack.c.l.b16 %v30
    %v42 = vunpack.c.l.b16 %v31
    %v43 = vpack.c.b16 %v42, %v41
    %vm45 = vcmask 130048
    %v47 = vsel %vm45, %v29, 0
    %49 = vmatprep.subr.bf16.mxu0 0
    %50 = vmatpush1.bf16.msra.mxu0 %v43
    %51 = vmatprep.subr.bf16.mxu0 0
    %52 = vmatpush1.bf16.msra.mxu0 0
    %53 = vmatprep.subr.bf16.mxu0 0
    %54 = vmatpush1.bf16.msra.mxu0 0
    %55 = vmatprep.subr.bf16.mxu0 0
    %56 = vmatpush1.bf16.msra.mxu0 0
    %57 = vmatprep.subr.bf16.mxu0 0
    %58 = vmatpush1.bf16.msra.mxu0 0
    %59 = vmatprep.subr.bf16.mxu0 0
    %60 = vmatpush1.bf16.msra.mxu0 0
    %61 = vmatprep.subr.bf16.mxu0 0
    %62 = vmatpush1.bf16.msra.mxu0 0
    %63 = vmatprep.subr.bf16.mxu0 0
    %64 = vmatpush1.bf16.msra.mxu0 0
    %65 = vmatprep.subr.bf16.mxu0 0
    %66 = vmatpush1.bf16.msra.mxu0 0
    %67 = vmatprep.subr.bf16.mxu0 0
    %68 = vmatpush1.bf16.msra.mxu0 0
    %69 = vmatprep.subr.bf16.mxu0 0
    %70 = vmatpush1.bf16.msra.mxu0 0
    %71 = vmatprep.subr.bf16.mxu0 0
    %72 = vmatpush1.bf16.msra.mxu0 0
    %73 = vmatprep.subr.bf16.mxu0 0
    %74 = vmatpush1.bf16.msra.mxu0 0
    %75 = vmatprep.subr.bf16.mxu0 0
    %76 = vmatpush1.bf16.msra.mxu0 0
    %77 = vmatprep.subr.bf16.mxu0 0
    %78 = vmatpush1.bf16.msra.mxu0 0
    %79 = vmatprep.subr.bf16.mxu0 0
    %80 = vmatpush1.bf16.msra.mxu0 0
    %81 = vmatprep.mubr.bf16.mxu0 0
    %82 = vmatmul.mubr.bf16.gmra.mrb[0].mxu0 %v47
    %v83 = vpop.f32.mrb[0].mxu0
    %v84 = vadd.f32 %v37, %v83
    %v85 = vpop.f32.mrb[0].mxu0
    %v86 = vpop.f32.mrb[0].mxu0
    %v87 = vpop.f32.mrb[0].mxu0
    %88 = vdwg.mxu0
    %v89 = vmax.f32 %v84, 0.0
    %v90 = vpack.c.bf16 %v89, %v89
    %s91 = scalar_lea.vmem [#allocation2], 64
    %v92 = vld [vmem:[%s91] sm:$0xf]
    %v93 = vld [vmem:[%s91 + $0x4] sm:$0xf]
    %v94 = vld [vmem:[%s91 + $0x8] sm:$0xf]
    %v95 = vld [vmem:[%s91 + $0xc] sm:$0xf]
    %v96 = vld [vmem:[%s91 + $0x10] sm:$0xf]
    %v97 = vld [vmem:[%s91 + $0x14] sm:$0xf]
    %v98 = vld [vmem:[%s91 + $0x18] sm:$0xf]
    %v99 = vld [vmem:[%s91 + $0x1c] sm:$0xf]
    %v100 = vld [vmem:[%s91 + $0x20] sm:$0xf]
    %v101 = vld [vmem:[%s91 + $0x24] sm:$0xf]
    %v102 = vld [vmem:[%s91 + $0x28] sm:$0xf]
    %v103 = vld [vmem:[%s91 + $0x2c] sm:$0xf]
    %v104 = vld [vmem:[%s91 + $0x30] sm:$0xf]
    %v105 = vld [vmem:[%s91 + $0x34] sm:$0xf]
    %v106 = vld [vmem:[%s91 + $0x38] sm:$0xf]
    %v107 = vld [vmem:[%s91 + $0x3c] sm:$0xf]
    %s108 = scalar_lea.vmem %s2, 1
    %v109 = vld [vmem:[%s108] sm:$0x1]
    %v111 = vlaneseq
    %v112 = vshrl.u32 %v111, 7
    %v113 = vsub.s32 0, %v112
    %v114 = vrot.slane %v109, %v113
    %v132 = vunpack.c.l.b16 %v92
    %v133 = vunpack.c.l.b16 %v93
    %v134 = vunpack.c.l.b16 %v94
    %v135 = vunpack.c.l.b16 %v95
    %v136 = vunpack.c.l.b16 %v96
    %v137 = vunpack.c.l.b16 %v97
    %v138 = vunpack.c.l.b16 %v98
    %v139 = vunpack.c.l.b16 %v99
    %v140 = vunpack.c.l.b16 %v100
    %v141 = vunpack.c.l.b16 %v101
    %v142 = vunpack.c.l.b16 %v102
    %v143 = vunpack.c.l.b16 %v103
    %v144 = vunpack.c.l.b16 %v104
    %v145 = vunpack.c.l.b16 %v105
    %v146 = vunpack.c.l.b16 %v106
    %v147 = vunpack.c.l.b16 %v107
    %v148 = vpack.c.b16 %v133, %v132
    %v149 = vpack.c.b16 %v135, %v134
    %v150 = vpack.c.b16 %v137, %v136
    %v151 = vpack.c.b16 %v139, %v138
    %v152 = vpack.c.b16 %v141, %v140
    %v153 = vpack.c.b16 %v143, %v142
    %v154 = vpack.c.b16 %v145, %v144
    %v155 = vpack.c.b16 %v147, %v146
    %164 = vmatprep.subr.bf16.mxu0 0
    %165 = vmatpush1.bf16.msra.mxu0 %v148
    %166 = vmatprep.subr.bf16.mxu0 0
    %167 = vmatpush1.bf16.msra.mxu0 %v149
    %168 = vmatprep.subr.bf16.mxu0 0
    %169 = vmatpush1.bf16.msra.mxu0 %v150
    %170 = vmatprep.subr.bf16.mxu0 0
    %171 = vmatpush1.bf16.msra.mxu0 %v151
    %172 = vmatprep.subr.bf16.mxu0 0
    %173 = vmatpush1.bf16.msra.mxu0 %v152
    %174 = vmatprep.subr.bf16.mxu0 0
    %175 = vmatpush1.bf16.msra.mxu0 %v153
    %176 = vmatprep.subr.bf16.mxu0 0
    %177 = vmatpush1.bf16.msra.mxu0 %v154
    %178 = vmatprep.subr.bf16.mxu0 0
    %179 = vmatpush1.bf16.msra.mxu0 %v155
    %180 = vmatprep.subr.bf16.mxu0 0
    %181 = vmatpush1.bf16.msra.mxu0 0
    %182 = vmatprep.subr.bf16.mxu0 0
    %183 = vmatpush1.bf16.msra.mxu0 0
    %184 = vmatprep.subr.bf16.mxu0 0
    %185 = vmatpush1.bf16.msra.mxu0 0
    %186 = vmatprep.subr.bf16.mxu0 0
    %187 = vmatpush1.bf16.msra.mxu0 0
    %188 = vmatprep.subr.bf16.mxu0 0
    %189 = vmatpush1.bf16.msra.mxu0 0
    %190 = vmatprep.subr.bf16.mxu0 0
    %191 = vmatpush1.bf16.msra.mxu0 0
    %192 = vmatprep.subr.bf16.mxu0 0
    %193 = vmatpush1.bf16.msra.mxu0 0
    %194 = vmatprep.subr.bf16.mxu0 0
    %195 = vmatpush1.bf16.msra.mxu0 0
    %196 = vmatprep.mubr.bf16.mxu0 0
    %197 = vmatmul.mubr.bf16.gmra.mrb[0].mxu0 %v90
    %v198 = vpop.f32.mrb[0].mxu0
    %v199 = vadd.f32 %v114, %v198
    %v200 = vpop.f32.mrb[0].mxu0
    %v201 = vpop.f32.mrb[0].mxu0
    %v202 = vpop.f32.mrb[0].mxu0
    %203 = vdwg.mxu0
    %v204 = vmax.f32 %v199, 0.0
    %v205 = vpack.c.bf16 %v204, %v204
    %s206 = scalar_lea.vmem [#allocation2], 128
    %v207 = vld [vmem:[%s206] sm:$0xf]
    %v208 = vld [vmem:[%s206 + $0x4] sm:$0xf]
    %v209 = vld [vmem:[%s206 + $0x8] sm:$0xf]
    %v210 = vld [vmem:[%s206 + $0xc] sm:$0xf]
    %v211 = vld [vmem:[%s206 + $0x10] sm:$0xf]
    %v212 = vld [vmem:[%s206 + $0x14] sm:$0xf]
    %v213 = vld [vmem:[%s206 + $0x18] sm:$0xf]
    %v214 = vld [vmem:[%s206 + $0x1c] sm:$0xf]
    %v215 = vld [vmem:[%s206 + $0x20] sm:$0xf]
    %v216 = vld [vmem:[%s206 + $0x24] sm:$0xf]
    %v217 = vld [vmem:[%s206 + $0x28] sm:$0xf]
    %v218 = vld [vmem:[%s206 + $0x2c] sm:$0xf]
    %v219 = vld [vmem:[%s206 + $0x30] sm:$0xf]
    %v220 = vld [vmem:[%s206 + $0x34] sm:$0xf]
    %v221 = vld [vmem:[%s206 + $0x38] sm:$0xf]
    %v222 = vld [vmem:[%s206 + $0x3c] sm:$0xf]
    %s223 = scalar_lea.vmem %s2, 2
    %v224 = vld [vmem:[%s223] sm:$0x1]
    %v226 = vlaneseq
    %v227 = vshrl.u32 %v226, 7
    %v228 = vsub.s32 0, %v227
    %v229 = vrot.slane %v224, %v228
    %v247 = vunpack.c.l.b16 %v207
    %v248 = vunpack.c.l.b16 %v208
    %v249 = vunpack.c.l.b16 %v209
    %v250 = vunpack.c.l.b16 %v210
    %v251 = vunpack.c.l.b16 %v211
    %v252 = vunpack.c.l.b16 %v212
    %v253 = vunpack.c.l.b16 %v213
    %v254 = vunpack.c.l.b16 %v214
    %v255 = vunpack.c.l.b16 %v215
    %v256 = vunpack.c.l.b16 %v216
    %v257 = vunpack.c.l.b16 %v217
    %v258 = vunpack.c.l.b16 %v218
    %v259 = vunpack.c.l.b16 %v219
    %v260 = vunpack.c.l.b16 %v220
    %v261 = vunpack.c.l.b16 %v221
    %v262 = vunpack.c.l.b16 %v222
    %v263 = vpack.c.b16 %v248, %v247
    %v264 = vpack.c.b16 %v250, %v249
    %v265 = vpack.c.b16 %v252, %v251
    %v266 = vpack.c.b16 %v254, %v253
    %v267 = vpack.c.b16 %v256, %v255
    %v268 = vpack.c.b16 %v258, %v257
    %v269 = vpack.c.b16 %v260, %v259
    %v270 = vpack.c.b16 %v262, %v261
    %279 = vmatprep.subr.bf16.mxu0 0
    %280 = vmatpush1.bf16.msra.mxu0 %v263
    %281 = vmatprep.subr.bf16.mxu0 0
    %282 = vmatpush1.bf16.msra.mxu0 %v264
    %283 = vmatprep.subr.bf16.mxu0 0
    %284 = vmatpush1.bf16.msra.mxu0 %v265
    %285 = vmatprep.subr.bf16.mxu0 0
    %286 = vmatpush1.bf16.msra.mxu0 %v266
    %287 = vmatprep.subr.bf16.mxu0 0
    %288 = vmatpush1.bf16.msra.mxu0 %v267
    %289 = vmatprep.subr.bf16.mxu0 0
    %290 = vmatpush1.bf16.msra.mxu0 %v268
    %291 = vmatprep.subr.bf16.mxu0 0
    %292 = vmatpush1.bf16.msra.mxu0 %v269
    %293 = vmatprep.subr.bf16.mxu0 0
    %294 = vmatpush1.bf16.msra.mxu0 %v270
    %295 = vmatprep.subr.bf16.mxu0 0
    %296 = vmatpush1.bf16.msra.mxu0 0
    %297 = vmatprep.subr.bf16.mxu0 0
    %298 = vmatpush1.bf16.msra.mxu0 0
    %299 = vmatprep.subr.bf16.mxu0 0
    %300 = vmatpush1.bf16.msra.mxu0 0
    %301 = vmatprep.subr.bf16.mxu0 0
    %302 = vmatpush1.bf16.msra.mxu0 0
    %303 = vmatprep.subr.bf16.mxu0 0
    %304 = vmatpush1.bf16.msra.mxu0 0
    %305 = vmatprep.subr.bf16.mxu0 0
    %306 = vmatpush1.bf16.msra.mxu0 0
    %307 = vmatprep.subr.bf16.mxu0 0
    %308 = vmatpush1.bf16.msra.mxu0 0
    %309 = vmatprep.subr.bf16.mxu0 0
    %310 = vmatpush1.bf16.msra.mxu0 0
    %311 = vmatprep.mubr.bf16.mxu0 0
    %312 = vmatmul.mubr.bf16.gmra.mrb[0].mxu0 %v205
    %v313 = vpop.f32.mrb[0].mxu0
    %v314 = vadd.f32 %v229, %v313
    %v315 = vpop.f32.mrb[0].mxu0
    %v316 = vpop.f32.mrb[0].mxu0
    %v317 = vpop.f32.mrb[0].mxu0
    %318 = vdwg.mxu0
    %v319 = vmax.f32 %v314, 0.0
    %v320 = vpack.c.bf16 %v319, %v319
    %s321 = scalar_lea.vmem [#allocation2], 192
    %v322 = vld [vmem:[%s321] sm:$0xf]
    %v323 = vld [vmem:[%s321 + $0x4] sm:$0xf]
    %v324 = vld [vmem:[%s321 + $0x8] sm:$0xf]
    %v325 = vld [vmem:[%s321 + $0xc] sm:$0xf]
    %v326 = vld [vmem:[%s321 + $0x10] sm:$0xf]
    %v327 = vld [vmem:[%s321 + $0x14] sm:$0xf]
    %v328 = vld [vmem:[%s321 + $0x18] sm:$0xf]
    %v329 = vld [vmem:[%s321 + $0x1c] sm:$0xf]
    %v330 = vld [vmem:[%s321 + $0x20] sm:$0xf]
    %v331 = vld [vmem:[%s321 + $0x24] sm:$0xf]
    %v332 = vld [vmem:[%s321 + $0x28] sm:$0xf]
    %v333 = vld [vmem:[%s321 + $0x2c] sm:$0xf]
    %v334 = vld [vmem:[%s321 + $0x30] sm:$0xf]
    %v335 = vld [vmem:[%s321 + $0x34] sm:$0xf]
    %v336 = vld [vmem:[%s321 + $0x38] sm:$0xf]
    %v337 = vld [vmem:[%s321 + $0x3c] sm:$0xf]
    %s338 = scalar_lea.vmem %s2, 3
    %v339 = vld [vmem:[%s338] sm:$0x1]
    %v341 = vlaneseq
    %v342 = vshrl.u32 %v341, 7
    %v343 = vsub.s32 0, %v342
    %v344 = vrot.slane %v339, %v343
    %v362 = vunpack.c.l.b16 %v322
    %v363 = vunpack.c.l.b16 %v323
    %v364 = vunpack.c.l.b16 %v324
    %v365 = vunpack.c.l.b16 %v325
    %v366 = vunpack.c.l.b16 %v326
    %v367 = vunpack.c.l.b16 %v327
    %v368 = vunpack.c.l.b16 %v328
    %v369 = vunpack.c.l.b16 %v329
    %v370 = vunpack.c.l.b16 %v330
    %v371 = vunpack.c.l.b16 %v331
    %v372 = vunpack.c.l.b16 %v332
    %v373 = vunpack.c.l.b16 %v333
    %v374 = vunpack.c.l.b16 %v334
    %v375 = vunpack.c.l.b16 %v335
    %v376 = vunpack.c.l.b16 %v336
    %v377 = vunpack.c.l.b16 %v337
    %v378 = vpack.c.b16 %v363, %v362
    %v379 = vpack.c.b16 %v365, %v364
    %v380 = vpack.c.b16 %v367, %v366
    %v381 = vpack.c.b16 %v369, %v368
    %v382 = vpack.c.b16 %v371, %v370
    %v383 = vpack.c.b16 %v373, %v372
    %v384 = vpack.c.b16 %v375, %v374
    %v385 = vpack.c.b16 %v377, %v376
    %394 = vmatprep.subr.bf16.mxu0 0
    %395 = vmatpush1.bf16.msra.mxu0 %v378
    %396 = vmatprep.subr.bf16.mxu0 0
    %397 = vmatpush1.bf16.msra.mxu0 %v379
    %398 = vmatprep.subr.bf16.mxu0 0
    %399 = vmatpush1.bf16.msra.mxu0 %v380
    %400 = vmatprep.subr.bf16.mxu0 0
    %401 = vmatpush1.bf16.msra.mxu0 %v381
    %402 = vmatprep.subr.bf16.mxu0 0
    %403 = vmatpush1.bf16.msra.mxu0 %v382
    %404 = vmatprep.subr.bf16.mxu0 0
    %405 = vmatpush1.bf16.msra.mxu0 %v383
    %406 = vmatprep.subr.bf16.mxu0 0
    %407 = vmatpush1.bf16.msra.mxu0 %v384
    %408 = vmatprep.subr.bf16.mxu0 0
    %409 = vmatpush1.bf16.msra.mxu0 %v385
    %410 = vmatprep.subr.bf16.mxu0 0
    %411 = vmatpush1.bf16.msra.mxu0 0
    %412 = vmatprep.subr.bf16.mxu0 0
    %413 = vmatpush1.bf16.msra.mxu0 0
    %414 = vmatprep.subr.bf16.mxu0 0
    %415 = vmatpush1.bf16.msra.mxu0 0
    %416 = vmatprep.subr.bf16.mxu0 0
    %417 = vmatpush1.bf16.msra.mxu0 0
    %418 = vmatprep.subr.bf16.mxu0 0
    %419 = vmatpush1.bf16.msra.mxu0 0
    %420 = vmatprep.subr.bf16.mxu0 0
    %421 = vmatpush1.bf16.msra.mxu0 0
    %422 = vmatprep.subr.bf16.mxu0 0
    %423 = vmatpush1.bf16.msra.mxu0 0
    %424 = vmatprep.subr.bf16.mxu0 0
    %425 = vmatpush1.bf16.msra.mxu0 0
    %426 = vmatprep.mubr.bf16.mxu0 0
    %427 = vmatmul.mubr.bf16.gmra.mrb[0].mxu0 %v320
    %v428 = vpop.f32.mrb[0].mxu0
    %v429 = vadd.f32 %v344, %v428
    %v430 = vpop.f32.mrb[0].mxu0
    %v431 = vpop.f32.mrb[0].mxu0
    %v432 = vpop.f32.mrb[0].mxu0
    %433 = vdwg.mxu0
    %v434 = vmax.f32 %v429, 0.0
    %v435 = vpack.c.bf16 %v434, %v434
    %s436 = scalar_lea.vmem [#allocation2], 256
    %v437 = vld [vmem:[%s436] sm:$0xf]
    %v438 = vld [vmem:[%s436 + $0x4] sm:$0xf]
    %v439 = vld [vmem:[%s436 + $0x8] sm:$0xf]
    %v440 = vld [vmem:[%s436 + $0xc] sm:$0xf]
    %v441 = vld [vmem:[%s436 + $0x10] sm:$0xf]
    %v442 = vld [vmem:[%s436 + $0x14] sm:$0xf]
    %v443 = vld [vmem:[%s436 + $0x18] sm:$0xf]
    %v444 = vld [vmem:[%s436 + $0x1c] sm:$0xf]
    %v445 = vld [vmem:[%s436 + $0x20] sm:$0xf]
    %v446 = vld [vmem:[%s436 + $0x24] sm:$0xf]
    %v447 = vld [vmem:[%s436 + $0x28] sm:$0xf]
    %v448 = vld [vmem:[%s436 + $0x2c] sm:$0xf]
    %v449 = vld [vmem:[%s436 + $0x30] sm:$0xf]
    %v450 = vld [vmem:[%s436 + $0x34] sm:$0xf]
    %v451 = vld [vmem:[%s436 + $0x38] sm:$0xf]
    %v452 = vld [vmem:[%s436 + $0x3c] sm:$0xf]
    %s453 = scalar_lea.vmem %s2, 4
    %v454 = vld [vmem:[%s453] sm:$0x1]
    %v456 = vlaneseq
    %v457 = vshrl.u32 %v456, 7
    %v458 = vsub.s32 0, %v457
    %v459 = vrot.slane %v454, %v458
    %v477 = vunpack.c.l.b16 %v437
    %v478 = vunpack.c.l.b16 %v438
    %v479 = vunpack.c.l.b16 %v439
    %v480 = vunpack.c.l.b16 %v440
    %v481 = vunpack.c.l.b16 %v441
    %v482 = vunpack.c.l.b16 %v442
    %v483 = vunpack.c.l.b16 %v443
    %v484 = vunpack.c.l.b16 %v444
    %v485 = vunpack.c.l.b16 %v445
    %v486 = vunpack.c.l.b16 %v446
    %v487 = vunpack.c.l.b16 %v447
    %v488 = vunpack.c.l.b16 %v448
    %v489 = vunpack.c.l.b16 %v449
    %v490 = vunpack.c.l.b16 %v450
    %v491 = vunpack.c.l.b16 %v451
    %v492 = vunpack.c.l.b16 %v452
    %v493 = vpack.c.b16 %v478, %v477
    %v494 = vpack.c.b16 %v480, %v479
    %v495 = vpack.c.b16 %v482, %v481
    %v496 = vpack.c.b16 %v484, %v483
    %v497 = vpack.c.b16 %v486, %v485
    %v498 = vpack.c.b16 %v488, %v487
    %v499 = vpack.c.b16 %v490, %v489
    %v500 = vpack.c.b16 %v492, %v491
    %509 = vmatprep.subr.bf16.mxu0 0
    %510 = vmatpush1.bf16.msra.mxu0 %v493
    %511 = vmatprep.subr.bf16.mxu0 0
    %512 = vmatpush1.bf16.msra.mxu0 %v494
    %513 = vmatprep.subr.bf16.mxu0 0
    %514 = vmatpush1.bf16.msra.mxu0 %v495
    %515 = vmatprep.subr.bf16.mxu0 0
    %516 = vmatpush1.bf16.msra.mxu0 %v496
    %517 = vmatprep.subr.bf16.mxu0 0
    %518 = vmatpush1.bf16.msra.mxu0 %v497
    %519 = vmatprep.subr.bf16.mxu0 0
    %520 = vmatpush1.bf16.msra.mxu0 %v498
    %521 = vmatprep.subr.bf16.mxu0 0
    %522 = vmatpush1.bf16.msra.mxu0 %v499
    %523 = vmatprep.subr.bf16.mxu0 0
    %524 = vmatpush1.bf16.msra.mxu0 %v500
    %525 = vmatprep.subr.bf16.mxu0 0
    %526 = vmatpush1.bf16.msra.mxu0 0
    %527 = vmatprep.subr.bf16.mxu0 0
    %528 = vmatpush1.bf16.msra.mxu0 0
    %529 = vmatprep.subr.bf16.mxu0 0
    %530 = vmatpush1.bf16.msra.mxu0 0
    %531 = vmatprep.subr.bf16.mxu0 0
    %532 = vmatpush1.bf16.msra.mxu0 0
    %533 = vmatprep.subr.bf16.mxu0 0
    %534 = vmatpush1.bf16.msra.mxu0 0
    %535 = vmatprep.subr.bf16.mxu0 0
    %536 = vmatpush1.bf16.msra.mxu0 0
    %537 = vmatprep.subr.bf16.mxu0 0
    %538 = vmatpush1.bf16.msra.mxu0 0
    %539 = vmatprep.subr.bf16.mxu0 0
    %540 = vmatpush1.bf16.msra.mxu0 0
    %541 = vmatprep.mubr.bf16.mxu0 0
    %542 = vmatmul.mubr.bf16.gmra.mrb[0].mxu0 %v435
    %v543 = vpop.f32.mrb[0].mxu0
    %v544 = vadd.f32 %v459, %v543
    %v545 = vpop.f32.mrb[0].mxu0
    %v546 = vpop.f32.mrb[0].mxu0
    %v547 = vpop.f32.mrb[0].mxu0
    %548 = vdwg.mxu0
    %v549 = vmax.f32 %v544, 0.0
    %v550 = vpack.c.bf16 %v549, %v549
    %s551 = scalar_lea.vmem [#allocation2], 320
    %v552 = vld [vmem:[%s551] sm:$0xf]
    %v553 = vld [vmem:[%s551 + $0x4] sm:$0xf]
    %v554 = vld [vmem:[%s551 + $0x8] sm:$0xf]
    %v555 = vld [vmem:[%s551 + $0xc] sm:$0xf]
    %v556 = vld [vmem:[%s551 + $0x10] sm:$0xf]
    %v557 = vld [vmem:[%s551 + $0x14] sm:$0xf]
    %v558 = vld [vmem:[%s551 + $0x18] sm:$0xf]
    %v559 = vld [vmem:[%s551 + $0x1c] sm:$0xf]
    %v560 = vld [vmem:[%s551 + $0x20] sm:$0xf]
    %v561 = vld [vmem:[%s551 + $0x24] sm:$0xf]
    %v562 = vld [vmem:[%s551 + $0x28] sm:$0xf]
    %v563 = vld [vmem:[%s551 + $0x2c] sm:$0xf]
    %v564 = vld [vmem:[%s551 + $0x30] sm:$0xf]
    %v565 = vld [vmem:[%s551 + $0x34] sm:$0xf]
    %v566 = vld [vmem:[%s551 + $0x38] sm:$0xf]
    %v567 = vld [vmem:[%s551 + $0x3c] sm:$0xf]
    %s568 = scalar_lea.vmem %s2, 5
    %v569 = vld [vmem:[%s568] sm:$0x1]
    %v571 = vlaneseq
    %v572 = vshrl.u32 %v571, 7
    %v573 = vsub.s32 0, %v572
    %v574 = vrot.slane %v569, %v573
    %v592 = vunpack.c.l.b16 %v552
    %v593 = vunpack.c.l.b16 %v553
    %v594 = vunpack.c.l.b16 %v554
    %v595 = vunpack.c.l.b16 %v555
    %v596 = vunpack.c.l.b16 %v556
    %v597 = vunpack.c.l.b16 %v557
    %v598 = vunpack.c.l.b16 %v558
    %v599 = vunpack.c.l.b16 %v559
    %v600 = vunpack.c.l.b16 %v560
    %v601 = vunpack.c.l.b16 %v561
    %v602 = vunpack.c.l.b16 %v562
    %v603 = vunpack.c.l.b16 %v563
    %v604 = vunpack.c.l.b16 %v564
    %v605 = vunpack.c.l.b16 %v565
    %v606 = vunpack.c.l.b16 %v566
    %v607 = vunpack.c.l.b16 %v567
    %v608 = vpack.c.b16 %v593, %v592
    %v609 = vpack.c.b16 %v595, %v594
    %v610 = vpack.c.b16 %v597, %v596
    %v611 = vpack.c.b16 %v599, %v598
    %v612 = vpack.c.b16 %v601, %v600
    %v613 = vpack.c.b16 %v603, %v602
    %v614 = vpack.c.b16 %v605, %v604
    %v615 = vpack.c.b16 %v607, %v606
    %624 = vmatprep.subr.bf16.mxu0 0
    %625 = vmatpush1.bf16.msra.mxu0 %v608
    %626 = vmatprep.subr.bf16.mxu0 0
    %627 = vmatpush1.bf16.msra.mxu0 %v609
    %628 = vmatprep.subr.bf16.mxu0 0
    %629 = vmatpush1.bf16.msra.mxu0 %v610
    %630 = vmatprep.subr.bf16.mxu0 0
    %631 = vmatpush1.bf16.msra.mxu0 %v611
    %632 = vmatprep.subr.bf16.mxu0 0
    %633 = vmatpush1.bf16.msra.mxu0 %v612
    %634 = vmatprep.subr.bf16.mxu0 0
    %635 = vmatpush1.bf16.msra.mxu0 %v613
    %636 = vmatprep.subr.bf16.mxu0 0
    %637 = vmatpush1.bf16.msra.mxu0 %v614
    %638 = vmatprep.subr.bf16.mxu0 0
    %639 = vmatpush1.bf16.msra.mxu0 %v615
    %640 = vmatprep.subr.bf16.mxu0 0
    %641 = vmatpush1.bf16.msra.mxu0 0
    %642 = vmatprep.subr.bf16.mxu0 0
    %643 = vmatpush1.bf16.msra.mxu0 0
    %644 = vmatprep.subr.bf16.mxu0 0
    %645 = vmatpush1.bf16.msra.mxu0 0
    %646 = vmatprep.subr.bf16.mxu0 0
    %647 = vmatpush1.bf16.msra.mxu0 0
    %648 = vmatprep.subr.bf16.mxu0 0
    %649 = vmatpush1.bf16.msra.mxu0 0
    %650 = vmatprep.subr.bf16.mxu0 0
    %651 = vmatpush1.bf16.msra.mxu0 0
    %652 = vmatprep.subr.bf16.mxu0 0
    %653 = vmatpush1.bf16.msra.mxu0 0
    %654 = vmatprep.subr.bf16.mxu0 0
    %655 = vmatpush1.bf16.msra.mxu0 0
    %656 = vmatprep.mubr.bf16.mxu0 0
    %657 = vmatmul.mubr.bf16.gmra.mrb[0].mxu0 %v550
    %v658 = vpop.f32.mrb[0].mxu0
    %v659 = vadd.f32 %v574, %v658
    %v660 = vpop.f32.mrb[0].mxu0
    %v661 = vpop.f32.mrb[0].mxu0
    %v662 = vpop.f32.mrb[0].mxu0
    %663 = vdwg.mxu0
    %664 = vst [vmem:[%s3] sm:$0xff] %v659
    // Predicated region
    $region18: #{dqn_forward.1} parent=1 // pred_check
      _
    $region19: #{dqn_forward.1} parent=1 // pred_check_branch
      %666 = sbr.rel (0) target = $region21
    $region20: #{dqn_forward.1} parent=1 // pred_region
      _
    $region21: #{dqn_forward.1} parent=1 // pred_fallthru
      _
    // Predicated region
    $region22: #{dqn_forward.1} parent=1 // pred_check
      _
    $region23: #{dqn_forward.1} parent=1 // pred_check_branch
      %668 = sbr.rel (0) target = $region25
    $region24: #{dqn_forward.1} parent=1 // pred_region
      _
    $region25: #{dqn_forward.1} parent=1 // pred_fallthru
      _
    %669 = vsyncpa [#allocation3], 1

</llo_original>
